<compile_context>
chip_gen: v6e
topology: v6e:2x2x1
jax: 0.10.0
libtpu: 0.0.40
codegen_flags: <defaults>
</compile_context>

<pallas_src>
import jax
import jax.numpy as jnp
from jax.experimental import pallas as pl
from jax.experimental.pallas import tpu as pltpu


def up_one_channel_kernel(x_ref,
                          w1_ref, b1_ref,
                          w2_ref, b2_ref,
                          w3_ref, b3_ref,
                          w4_ref, b4_ref,
                          w5_ref, b5_ref,
                          o_ref):
    # x_ref: (1, TM) tile of pixels, channel-major (channels on sublanes).
    x = x_ref[...]  # (1, TM) f32

    # Layer 1 (1 -> 64): K=1 contraction == broadcast multiply-add on the VPU.
    h = jnp.maximum(w1_ref[...] * x + b1_ref[...], 0.0)            # (64, TM)

    # Layers 2-4 (64 -> 64) on the MXU, f32 accumulate, bias + ReLU on the VPU.
    h = jnp.maximum(
        jnp.dot(w2_ref[...], h, preferred_element_type=jnp.float32) + b2_ref[...], 0.0)
    h = jnp.maximum(
        jnp.dot(w3_ref[...], h, preferred_element_type=jnp.float32) + b3_ref[...], 0.0)
    h = jnp.maximum(
        jnp.dot(w4_ref[...], h, preferred_element_type=jnp.float32) + b4_ref[...], 0.0)

    # Layer 5 (64 -> 16), then XQuantize.forward == torch.round (half-to-even,
    # which jnp.round also implements).
    h = jnp.dot(w5_ref[...], h, preferred_element_type=jnp.float32) + b5_ref[...]
    o_ref[...] = jnp.round(h).astype(o_ref.dtype)                   # (16, TM)


def up_one_channel(x_nchw, params, *, tm=2048):
    """x_nchw: (N, 1, H, W) float32.  Returns (N, 16, H, W) float32."""
    n, cin, h, w = x_nchw.shape
    assert cin == 1
    p = h * w

    # Lane-axis tile: multiple of 128, clamped so tiny inputs don't over-pad.
    tm_eff = min(tm, pl.cdiv(p, 128) * 128)
    p_pad = pl.cdiv(p, tm_eff) * tm_eff

    # Pure reshape into channel-major pixel layout (no transpose).
    x_flat = x_nchw.reshape(n, 1, p)
    if p_pad != p:
        x_flat = jnp.pad(x_flat, ((0, 0), (0, 0), (0, p_pad - p)))

    (w1, b1), (w2, b2), (w3, b3), (w4, b4), (w5, b5) = params
    cout = w5.shape[0]

    # Small weights/biases: whole-array VMEM residents (no per-step tiling).
    weight_spec = pl.BlockSpec(memory_space=pltpu.MemorySpace.VMEM)

    grid = (n, p_pad // tm_eff)

    # Advisory cost hint so XLA schedules neighbors around the kernel.
    total_pixels = n * p_pad
    flops = 2 * (1 * 64 + 3 * 64 * 64 + 64 * 16) * total_pixels
    bytes_accessed = total_pixels * (cin * 4 + cout * 4)
    cost = pl.CostEstimate(flops=flops, transcendentals=0,
                           bytes_accessed=bytes_accessed)

    out_flat = pl.pallas_call(
        up_one_channel_kernel,
        out_shape=jax.ShapeDtypeStruct((n, cout, p_pad), jnp.float32),
        grid_spec=pltpu.PrefetchScalarGridSpec(
            num_scalar_prefetch=0,
            grid=grid,
            in_specs=[
                # (N, 1, P): squeeze batch, kernel sees (1, TM).
                pl.BlockSpec((None, 1, tm_eff), lambda nb, i: (nb, 0, i)),
                weight_spec, weight_spec,   # w1, b1
                weight_spec, weight_spec,   # w2, b2
                weight_spec, weight_spec,   # w3, b3
                weight_spec, weight_spec,   # w4, b4
                weight_spec, weight_spec,   # w5, b5
            ],
            # (N, 16, P): squeeze batch, kernel sees (16, TM) -> dense lane stores.
            out_specs=pl.BlockSpec((None, cout, tm_eff), lambda nb, i: (nb, 0, i)),
        ),
        compiler_params=pltpu.CompilerParams(
            dimension_semantics=("parallel", "parallel")),
        cost_estimate=cost,
    )(x_flat, w1, b1, w2, b2, w3, b3, w4, b4, w5, b5)

    if p_pad != p:
        out_flat = out_flat[:, :, :p]
    # Pure reshape back to NCHW (no transpose needed in this layout).
    return out_flat.reshape(n, cout, h, w)


def init_params(key):
    """Deterministic kaiming_normal-style init (std = sqrt(2/fan_in)), bias = 0.
    Weights stored channel-major: (Cout, Cin) == squeezed PyTorch conv weight.
    Biases stored (Cout, 1) so they broadcast over the lane (pixel) axis."""
    dims = [(1, 64), (64, 64), (64, 64), (64, 64), (64, 16)]
    params = []
    for (cin, cout) in dims:
        key, sub = jax.random.split(key)
        std = (2.0 / cin) ** 0.5  # fan_in of a 1x1 conv = cin
        w = std * jax.random.normal(sub, (cout, cin), dtype=jnp.float32)
        b = jnp.zeros((cout, 1), dtype=jnp.float32)
        params.append((w, b))
    return params


def reference(x_nchw, params):
    # Pure-JAX reference of the same math for a sanity check.
    n, cin, hh, ww = x_nchw.shape
    h = x_nchw.reshape(n, cin, hh * ww)
    for idx, (wt, bi) in enumerate(params):
        h = jnp.einsum('oc,ncp->nop', wt, h) + bi[None, :, :]
        if idx < len(params) - 1:
            h = jax.nn.relu(h)
    h = jnp.round(h)
    return h.reshape(n, -1, hh, ww)


if __name__ == "__main__":
    key = jax.random.PRNGKey(0)
    k_x, k_p = jax.random.split(key)

    # Small NCHW input consistent with the module: 1 input channel.
    x = jax.random.normal(k_x, (2, 1, 16, 16), dtype=jnp.float32)
    params = init_params(k_p)

    out = up_one_channel(x, params)
    out = jax.block_until_ready(out)

    ref = reference(x, params)
    assert out.shape == (2, 16, 16, 16), out.shape
    assert jnp.allclose(out, ref, atol=1e-4), "mismatch vs reference"

    print("KERNEL_OK")
</pallas_src>

<mosaic_0001>
module attributes {stable_mosaic.version = 11 : i64} {
  func.func @up_one_channel_kernel(%arg0: i32, %arg1: i32, %arg2: memref<1x1x256xf32, #tpu.memory_space<vmem>>, %arg3: memref<64x1xf32, #tpu.memory_space<vmem>>, %arg4: memref<64x1xf32, #tpu.memory_space<vmem>>, %arg5: memref<64x64xf32, #tpu.memory_space<vmem>>, %arg6: memref<64x1xf32, #tpu.memory_space<vmem>>, %arg7: memref<64x64xf32, #tpu.memory_space<vmem>>, %arg8: memref<64x1xf32, #tpu.memory_space<vmem>>, %arg9: memref<64x64xf32, #tpu.memory_space<vmem>>, %arg10: memref<64x1xf32, #tpu.memory_space<vmem>>, %arg11: memref<16x64xf32, #tpu.memory_space<vmem>>, %arg12: memref<16x1xf32, #tpu.memory_space<vmem>>, %arg13: memref<1x16x256xf32, #tpu.memory_space<vmem>>) attributes {dimension_semantics = [#tpu.dimension_semantics<parallel>, #tpu.dimension_semantics<parallel>], iteration_bounds = array<i64: 2, 1>, scalar_prefetch = 0 : i64, scratch_operands = 0 : i64, tpu.core_type = #tpu.core_type<tc>, window_params = [{transform_indices = @transform_0, window_bounds = array<i64: 1, 1, 256>}, {pipeline_mode = #tpu.pipeline_mode<synchronous>, transform_indices = @transform_1, window_bounds = array<i64: 64, 1>}, {pipeline_mode = #tpu.pipeline_mode<synchronous>, transform_indices = @transform_2, window_bounds = array<i64: 64, 1>}, {pipeline_mode = #tpu.pipeline_mode<synchronous>, transform_indices = @transform_3, window_bounds = array<i64: 64, 64>}, {pipeline_mode = #tpu.pipeline_mode<synchronous>, transform_indices = @transform_4, window_bounds = array<i64: 64, 1>}, {pipeline_mode = #tpu.pipeline_mode<synchronous>, transform_indices = @transform_5, window_bounds = array<i64: 64, 64>}, {pipeline_mode = #tpu.pipeline_mode<synchronous>, transform_indices = @transform_6, window_bounds = array<i64: 64, 1>}, {pipeline_mode = #tpu.pipeline_mode<synchronous>, transform_indices = @transform_7, window_bounds = array<i64: 64, 64>}, {pipeline_mode = #tpu.pipeline_mode<synchronous>, transform_indices = @transform_8, window_bounds = array<i64: 64, 1>}, {pipeline_mode = #tpu.pipeline_mode<synchronous>, transform_indices = @transform_9, window_bounds = array<i64: 16, 64>}, {pipeline_mode = #tpu.pipeline_mode<synchronous>, transform_indices = @transform_10, window_bounds = array<i64: 16, 1>}, {transform_indices = @transform_11, window_bounds = array<i64: 1, 16, 256>}]} {
    %c0 = arith.constant 0 : index
    %c0_0 = arith.constant 0 : index
    %c0_1 = arith.constant 0 : index
    %0 = vector.load %arg2[%c0, %c0_0, %c0_1] : memref<1x1x256xf32, #tpu.memory_space<vmem>>, vector<1x1x256xf32>
    %1 = vector.shape_cast %0 : vector<1x1x256xf32> to vector<1x256xf32>
    %c0_2 = arith.constant 0 : index
    %c0_3 = arith.constant 0 : index
    %2 = vector.load %arg3[%c0_2, %c0_3] : memref<64x1xf32, #tpu.memory_space<vmem>>, vector<64x1xf32>
    %3 = vector.broadcast %2 : vector<64x1xf32> to vector<64x256xf32>
    %4 = vector.broadcast %1 : vector<1x256xf32> to vector<64x256xf32>
    %5 = arith.mulf %3, %4 : vector<64x256xf32>
    %c0_4 = arith.constant 0 : index
    %c0_5 = arith.constant 0 : index
    %6 = vector.load %arg4[%c0_4, %c0_5] : memref<64x1xf32, #tpu.memory_space<vmem>>, vector<64x1xf32>
    %7 = vector.broadcast %6 : vector<64x1xf32> to vector<64x256xf32>
    %8 = arith.addf %5, %7 : vector<64x256xf32>
    %cst = arith.constant 0.000000e+00 : f32
    %9 = vector.broadcast %cst : f32 to vector<64x256xf32>
    %10 = arith.maximumf %8, %9 : vector<64x256xf32>
    %c0_6 = arith.constant 0 : index
    %c0_7 = arith.constant 0 : index
    %11 = vector.load %arg5[%c0_6, %c0_7] : memref<64x64xf32, #tpu.memory_space<vmem>>, vector<64x64xf32>
    %cst_8 = arith.constant dense<0.000000e+00> : vector<64x256xf32>
    %12 = tpu.matmul %11, %10, %cst_8 {dimension_numbers = #tpu.dot_dimension_numbers<[1], [0], [0], [1], [0, 0, 1, 1], [], []>} : vector<64x64xf32>, vector<64x256xf32>, vector<64x256xf32> -> vector<64x256xf32>
    %c0_9 = arith.constant 0 : index
    %c0_10 = arith.constant 0 : index
    %13 = vector.load %arg6[%c0_9, %c0_10] : memref<64x1xf32, #tpu.memory_space<vmem>>, vector<64x1xf32>
    %14 = vector.broadcast %13 : vector<64x1xf32> to vector<64x256xf32>
    %15 = arith.addf %12, %14 : vector<64x256xf32>
    %cst_11 = arith.constant 0.000000e+00 : f32
    %16 = vector.broadcast %cst_11 : f32 to vector<64x256xf32>
    %17 = arith.maximumf %15, %16 : vector<64x256xf32>
    %c0_12 = arith.constant 0 : index
    %c0_13 = arith.constant 0 : index
    %18 = vector.load %arg7[%c0_12, %c0_13] : memref<64x64xf32, #tpu.memory_space<vmem>>, vector<64x64xf32>
    %cst_14 = arith.constant dense<0.000000e+00> : vector<64x256xf32>
    %19 = tpu.matmul %18, %17, %cst_14 {dimension_numbers = #tpu.dot_dimension_numbers<[1], [0], [0], [1], [0, 0, 1, 1], [], []>} : vector<64x64xf32>, vector<64x256xf32>, vector<64x256xf32> -> vector<64x256xf32>
    %c0_15 = arith.constant 0 : index
    %c0_16 = arith.constant 0 : index
    %20 = vector.load %arg8[%c0_15, %c0_16] : memref<64x1xf32, #tpu.memory_space<vmem>>, vector<64x1xf32>
    %21 = vector.broadcast %20 : vector<64x1xf32> to vector<64x256xf32>
    %22 = arith.addf %19, %21 : vector<64x256xf32>
    %cst_17 = arith.constant 0.000000e+00 : f32
    %23 = vector.broadcast %cst_17 : f32 to vector<64x256xf32>
    %24 = arith.maximumf %22, %23 : vector<64x256xf32>
    %c0_18 = arith.constant 0 : index
    %c0_19 = arith.constant 0 : index
    %25 = vector.load %arg9[%c0_18, %c0_19] : memref<64x64xf32, #tpu.memory_space<vmem>>, vector<64x64xf32>
    %cst_20 = arith.constant dense<0.000000e+00> : vector<64x256xf32>
    %26 = tpu.matmul %25, %24, %cst_20 {dimension_numbers = #tpu.dot_dimension_numbers<[1], [0], [0], [1], [0, 0, 1, 1], [], []>} : vector<64x64xf32>, vector<64x256xf32>, vector<64x256xf32> -> vector<64x256xf32>
    %c0_21 = arith.constant 0 : index
    %c0_22 = arith.constant 0 : index
    %27 = vector.load %arg10[%c0_21, %c0_22] : memref<64x1xf32, #tpu.memory_space<vmem>>, vector<64x1xf32>
    %28 = vector.broadcast %27 : vector<64x1xf32> to vector<64x256xf32>
    %29 = arith.addf %26, %28 : vector<64x256xf32>
    %cst_23 = arith.constant 0.000000e+00 : f32
    %30 = vector.broadcast %cst_23 : f32 to vector<64x256xf32>
    %31 = arith.maximumf %29, %30 : vector<64x256xf32>
    %c0_24 = arith.constant 0 : index
    %c0_25 = arith.constant 0 : index
    %32 = vector.load %arg11[%c0_24, %c0_25] : memref<16x64xf32, #tpu.memory_space<vmem>>, vector<16x64xf32>
    %cst_26 = arith.constant dense<0.000000e+00> : vector<16x256xf32>
    %33 = tpu.matmul %32, %31, %cst_26 {dimension_numbers = #tpu.dot_dimension_numbers<[1], [0], [0], [1], [0, 0, 1, 1], [], []>} : vector<16x64xf32>, vector<64x256xf32>, vector<16x256xf32> -> vector<16x256xf32>
    %c0_27 = arith.constant 0 : index
    %c0_28 = arith.constant 0 : index
    %34 = vector.load %arg12[%c0_27, %c0_28] : memref<16x1xf32, #tpu.memory_space<vmem>>, vector<16x1xf32>
    %35 = vector.broadcast %34 : vector<16x1xf32> to vector<16x256xf32>
    %36 = arith.addf %33, %35 : vector<16x256xf32>
    %37 = math.roundeven %36 : vector<16x256xf32>
    %c0_29 = arith.constant 0 : index
    %c0_30 = arith.constant 0 : index
    %c0_31 = arith.constant 0 : index
    %38 = vector.load %arg13[%c0_29, %c0_30, %c0_31] : memref<1x16x256xf32, #tpu.memory_space<vmem>>, vector<1x16x256xf32>
    %39 = vector.shape_cast %38 : vector<1x16x256xf32> to vector<16x256xf32>
    %40 = vector.shape_cast %37 : vector<16x256xf32> to vector<1x16x256xf32>
    tpu.vector_store %arg13[%c0_29, %c0_30, %c0_31], %40 {strides = array<i32>} : memref<1x16x256xf32, #tpu.memory_space<vmem>>, vector<1x16x256xf32>,
    return
  }
  func.func @transform_0(%arg0: i32, %arg1: i32) -> (i32, i32, i32) {
    %c0_i32 = arith.constant 0 : i32
    %c0_i32_0 = arith.constant 0 : i32
    return %arg0, %c0_i32, %arg1 : i32, i32, i32
  }
  func.func @transform_1(%arg0: i32, %arg1: i32) -> (i32, i32) {
    %c0_i32 = arith.constant 0 : i32
    %c0_i32_0 = arith.constant 0 : i32
    %c0_i32_1 = arith.constant 0 : i32
    return %c0_i32, %c0_i32_0 : i32, i32
  }
  func.func @transform_2(%arg0: i32, %arg1: i32) -> (i32, i32) {
    %c0_i32 = arith.constant 0 : i32
    %c0_i32_0 = arith.constant 0 : i32
    %c0_i32_1 = arith.constant 0 : i32
    return %c0_i32, %c0_i32_0 : i32, i32
  }
  func.func @transform_3(%arg0: i32, %arg1: i32) -> (i32, i32) {
    %c0_i32 = arith.constant 0 : i32
    %c0_i32_0 = arith.constant 0 : i32
    %c0_i32_1 = arith.constant 0 : i32
    return %c0_i32, %c0_i32_0 : i32, i32
  }
  func.func @transform_4(%arg0: i32, %arg1: i32) -> (i32, i32) {
    %c0_i32 = arith.constant 0 : i32
    %c0_i32_0 = arith.constant 0 : i32
    %c0_i32_1 = arith.constant 0 : i32
    return %c0_i32, %c0_i32_0 : i32, i32
  }
  func.func @transform_5(%arg0: i32, %arg1: i32) -> (i32, i32) {
    %c0_i32 = arith.constant 0 : i32
    %c0_i32_0 = arith.constant 0 : i32
    %c0_i32_1 = arith.constant 0 : i32
    return %c0_i32, %c0_i32_0 : i32, i32
  }
  func.func @transform_6(%arg0: i32, %arg1: i32) -> (i32, i32) {
    %c0_i32 = arith.constant 0 : i32
    %c0_i32_0 = arith.constant 0 : i32
    %c0_i32_1 = arith.constant 0 : i32
    return %c0_i32, %c0_i32_0 : i32, i32
  }
  func.func @transform_7(%arg0: i32, %arg1: i32) -> (i32, i32) {
    %c0_i32 = arith.constant 0 : i32
    %c0_i32_0 = arith.constant 0 : i32
    %c0_i32_1 = arith.constant 0 : i32
    return %c0_i32, %c0_i32_0 : i32, i32
  }
  func.func @transform_8(%arg0: i32, %arg1: i32) -> (i32, i32) {
    %c0_i32 = arith.constant 0 : i32
    %c0_i32_0 = arith.constant 0 : i32
    %c0_i32_1 = arith.constant 0 : i32
    return %c0_i32, %c0_i32_0 : i32, i32
  }
  func.func @transform_9(%arg0: i32, %arg1: i32) -> (i32, i32) {
    %c0_i32 = arith.constant 0 : i32
    %c0_i32_0 = arith.constant 0 : i32
    %c0_i32_1 = arith.constant 0 : i32
    return %c0_i32, %c0_i32_0 : i32, i32
  }
  func.func @transform_10(%arg0: i32, %arg1: i32) -> (i32, i32) {
    %c0_i32 = arith.constant 0 : i32
    %c0_i32_0 = arith.constant 0 : i32
    %c0_i32_1 = arith.constant 0 : i32
    return %c0_i32, %c0_i32_0 : i32, i32
  }
  func.func @transform_11(%arg0: i32, %arg1: i32) -> (i32, i32, i32) {
    %c0_i32 = arith.constant 0 : i32
    %c0_i32_0 = arith.constant 0 : i32
    return %arg0, %c0_i32, %arg1 : i32, i32, i32
  }
}

</mosaic_0001>

<llo_original>
// kernel: tpu_custom_call.1
$region0: #{tpu_custom_call.1}
  #allocation0 [shape = 'u32[]', space=smem, size = 0x4, offset = 0x4, fixed_abs, tag = 'smem constant byte address 0x4 - core index']
  #allocation1 [shape = 'u32[144,128]{1,0:T(1,128)}', space=vmem, size = 0x12000, scoped, tag = 'internal scratch']
  %s0 = inlined_call_operand.vmem [shape: f32[2,1,256], index: 0, kind: input, shape index: {}]
  %s1 = inlined_call_operand.vmem [shape: f32[64,1], index: 1, kind: input, shape index: {}]
  %s2 = inlined_call_operand.vmem [shape: f32[64,1], index: 2, kind: input, shape index: {}]
  %s3 = inlined_call_operand.vmem [shape: f32[64,64], index: 3, kind: input, shape index: {}]
  %s4 = inlined_call_operand.vmem [shape: f32[64,1], index: 4, kind: input, shape index: {}]
  %s5 = inlined_call_operand.vmem [shape: f32[64,64], index: 5, kind: input, shape index: {}]
  %s6 = inlined_call_operand.vmem [shape: f32[64,1], index: 6, kind: input, shape index: {}]
  %s7 = inlined_call_operand.vmem [shape: f32[64,64], index: 7, kind: input, shape index: {}]
  %s8 = inlined_call_operand.vmem [shape: f32[64,1], index: 8, kind: input, shape index: {}]
  %s9 = inlined_call_operand.vmem [shape: f32[16,64], index: 9, kind: input, shape index: {}]
  %s10 = inlined_call_operand.vmem [shape: f32[16,1], index: 10, kind: input, shape index: {}]
  %s11 = inlined_call_operand.hbm [shape: f32[2,16,256], index: 11, kind: output, shape index: {}]
  %s12 = sld [smem:[#allocation0]]
  $region77: #{tpu_custom_call.1} parent=0
    _
  %s14 = ssub.s32 1, %s12
  %s15 = scalar_select 0, %s14, %s12
  $region1: #{tpu_custom_call.1} parent=0
    #allocation2 [shape = 'u8[32768]{0}', space=vmem, size = 0x8000, scoped, tag = 'output window, operand 0']
    #allocation3 [shape = 's32[2]{0}', space=sflag, size = 0x8, scoped, tag = 'scoped memory for tpu_custom_call.1']
    %16 = vsyncpa [#allocation3], 0
    %s17 = scalar_lea.sflag [#allocation3], 1
    %18 = vsyncpa %s17, 0
    loop: start=0, step=1, limit=4
    $region2: #{tpu_custom_call.1} parent=1 // loop_pre_header
      _
    $region3: #{tpu_custom_call.1} parent=1 // loop_header
      %s20 = sphi 0, %s24
      %p21 = scmp.ge.s32.totalorder %s20, 4
      %s27 = sphi 0, %s39
      %s28 = sphi 0, %s35
      %s29 = sphi 0, %s27
      %s30 = sphi 0, %s28
      %s31 = sphi 0, %s29
      %s32 = sphi 0, %s30
      %s44 = sphi 0, %s46
      %s47 = sphi 0, %s44
      %s48 = sphi 0, %s47
      %s64 = sphi 0, %s48
      %s68 = sphi 0, %s68
      %s70 = sphi 0, %s68
      %s71 = sphi 0, %s70
      %s85 = sphi 0, %s71
      %s89 = sphi 0, %s89
      %s91 = sphi 0, %s89
      %s92 = sphi 0, %s91
      %s106 = sphi 0, %s92
      %s110 = sphi 0, %s110
      %s112 = sphi 0, %s110
      %s113 = sphi 0, %s112
      %s127 = sphi 0, %s113
      %s131 = sphi 0, %s131
      %s133 = sphi 0, %s131
      %s134 = sphi 0, %s133
      %s148 = sphi 0, %s134
      %s152 = sphi 0, %s152
      %s154 = sphi 0, %s152
      %s155 = sphi 0, %s154
      %s169 = sphi 0, %s155
      %s173 = sphi 0, %s173
      %s175 = sphi 0, %s173
      %s176 = sphi 0, %s175
      %s190 = sphi 0, %s176
      %s194 = sphi 0, %s194
      %s196 = sphi 0, %s194
      %s197 = sphi 0, %s196
      %s211 = sphi 0, %s197
      %s215 = sphi 0, %s215
      %s217 = sphi 0, %s215
      %s218 = sphi 0, %s217
      %s232 = sphi 0, %s218
      %s236 = sphi 0, %s236
      %s238 = sphi 0, %s236
      %s239 = sphi 0, %s238
      %s253 = sphi 0, %s239
      %s257 = sphi 0, %s257
      %s259 = sphi 0, %s257
      %s260 = sphi 0, %s259
      %s274 = sphi 0, %s260
      %s282 = sphi 0, %s284
      %s285 = sphi 0, %s282
      %s286 = sphi 0, %s285
      %s302 = sphi 0, %s286
    $region4: #{tpu_custom_call.1} parent=1 // loop_header_branch
      %23 = sbr.rel (%p21) target = $region8
    $region5: #{tpu_custom_call.1} parent=1 // loop_body
      %s25 = ssub.s32 %s20, 1
      %s26 = ssub.s32 %s20, 2
      %s33 = sadd.s32 1, %s28
      %p34 = scmp.ge.s32.totalorder %s33, 1
      %s35 = scalar_select %p34, 0, %s33
      %s36 = sadd.s32 1, %s27
      %s37 = scalar_select %p34, %s36, %s27
      %p38 = scmp.ge.s32.totalorder %s37, 2
      %s39 = scalar_select %p38, 0, %s37
      %s40 = ssub.s32 %s27, %s39
      %s41 = ssub.s32 %s28, %s35
      %s42 = sor.u32 %s40, %s41
      %p43 = scmp.eq.s32.totalorder %s42, 0
      %s45 = sadd.s32 %s44, 1
      %s46 = scalar_select %p43, %s44, %s45
      %p49 = pneg %p43
      %p50 = scmp.eq.s32.totalorder %s20, 1
      %p51 = por %p49, %p50
      %p52 = scmp.ne.s32.totalorder %s44, %s47
      %p53 = scmp.eq.s32.totalorder %s20, 0
      %p54 = por %p52, %p53
      %p55 = scmp.ne.s32.totalorder %s44, %s47
      %p56 = scmp.eq.s32.totalorder %s25, 1
      %p57 = por %p55, %p56
      %p58 = scmp.ne.s32.totalorder %s47, %s48
      %p59 = scmp.eq.s32.totalorder %s25, 0
      %p60 = por %p58, %p59
      %p61 = scmp.ne.s32.totalorder %s47, %s48
      %p62 = scmp.eq.s32.totalorder %s26, 1
      %p63 = por %p61, %p62
      %p65 = scmp.ne.s32.totalorder %s48, %s64
      %p66 = scmp.eq.s32.totalorder %s26, 0
      %p67 = por %p65, %p66
      %s69 = sadd.s32 %s68, 1
      %p72 = scmp.eq.s32.totalorder %s20, 1
      %p73 = scmp.ne.s32.totalorder %s68, %s70
      %p74 = scmp.eq.s32.totalorder %s20, 0
      %p75 = por %p73, %p74
      %p76 = scmp.ne.s32.totalorder %s68, %s70
      %p77 = scmp.eq.s32.totalorder %s25, 1
      %p78 = por %p76, %p77
      %p79 = scmp.ne.s32.totalorder %s70, %s71
      %p80 = scmp.eq.s32.totalorder %s25, 0
      %p81 = por %p79, %p80
      %p82 = scmp.ne.s32.totalorder %s70, %s71
      %p83 = scmp.eq.s32.totalorder %s26, 1
      %p84 = por %p82, %p83
      %p86 = scmp.ne.s32.totalorder %s71, %s85
      %p87 = scmp.eq.s32.totalorder %s26, 0
      %p88 = por %p86, %p87
      %s90 = sadd.s32 %s89, 1
      %p93 = scmp.eq.s32.totalorder %s20, 1
      %p94 = scmp.ne.s32.totalorder %s89, %s91
      %p95 = scmp.eq.s32.totalorder %s20, 0
      %p96 = por %p94, %p95
      %p97 = scmp.ne.s32.totalorder %s89, %s91
      %p98 = scmp.eq.s32.totalorder %s25, 1
      %p99 = por %p97, %p98
      %p100 = scmp.ne.s32.totalorder %s91, %s92
      %p101 = scmp.eq.s32.totalorder %s25, 0
      %p102 = por %p100, %p101
      %p103 = scmp.ne.s32.totalorder %s91, %s92
      %p104 = scmp.eq.s32.totalorder %s26, 1
      %p105 = por %p103, %p104
      %p107 = scmp.ne.s32.totalorder %s92, %s106
      %p108 = scmp.eq.s32.totalorder %s26, 0
      %p109 = por %p107, %p108
      %s111 = sadd.s32 %s110, 1
      %p114 = scmp.eq.s32.totalorder %s20, 1
      %p115 = scmp.ne.s32.totalorder %s110, %s112
      %p116 = scmp.eq.s32.totalorder %s20, 0
      %p117 = por %p115, %p116
      %p118 = scmp.ne.s32.totalorder %s110, %s112
      %p119 = scmp.eq.s32.totalorder %s25, 1
      %p120 = por %p118, %p119
      %p121 = scmp.ne.s32.totalorder %s112, %s113
      %p122 = scmp.eq.s32.totalorder %s25, 0
      %p123 = por %p121, %p122
      %p124 = scmp.ne.s32.totalorder %s112, %s113
      %p125 = scmp.eq.s32.totalorder %s26, 1
      %p126 = por %p124, %p125
      %p128 = scmp.ne.s32.totalorder %s113, %s127
      %p129 = scmp.eq.s32.totalorder %s26, 0
      %p130 = por %p128, %p129
      %s132 = sadd.s32 %s131, 1
      %p135 = scmp.eq.s32.totalorder %s20, 1
      %p136 = scmp.ne.s32.totalorder %s131, %s133
      %p137 = scmp.eq.s32.totalorder %s20, 0
      %p138 = por %p136, %p137
      %p139 = scmp.ne.s32.totalorder %s131, %s133
      %p140 = scmp.eq.s32.totalorder %s25, 1
      %p141 = por %p139, %p140
      %p142 = scmp.ne.s32.totalorder %s133, %s134
      %p143 = scmp.eq.s32.totalorder %s25, 0
      %p144 = por %p142, %p143
      %p145 = scmp.ne.s32.totalorder %s133, %s134
      %p146 = scmp.eq.s32.totalorder %s26, 1
      %p147 = por %p145, %p146
      %p149 = scmp.ne.s32.totalorder %s134, %s148
      %p150 = scmp.eq.s32.totalorder %s26, 0
      %p151 = por %p149, %p150
      %s153 = sadd.s32 %s152, 1
      %p156 = scmp.eq.s32.totalorder %s20, 1
      %p157 = scmp.ne.s32.totalorder %s152, %s154
      %p158 = scmp.eq.s32.totalorder %s20, 0
      %p159 = por %p157, %p158
      %p160 = scmp.ne.s32.totalorder %s152, %s154
      %p161 = scmp.eq.s32.totalorder %s25, 1
      %p162 = por %p160, %p161
      %p163 = scmp.ne.s32.totalorder %s154, %s155
      %p164 = scmp.eq.s32.totalorder %s25, 0
      %p165 = por %p163, %p164
      %p166 = scmp.ne.s32.totalorder %s154, %s155
      %p167 = scmp.eq.s32.totalorder %s26, 1
      %p168 = por %p166, %p167
      %p170 = scmp.ne.s32.totalorder %s155, %s169
      %p171 = scmp.eq.s32.totalorder %s26, 0
      %p172 = por %p170, %p171
      %s174 = sadd.s32 %s173, 1
      %p177 = scmp.eq.s32.totalorder %s20, 1
      %p178 = scmp.ne.s32.totalorder %s173, %s175
      %p179 = scmp.eq.s32.totalorder %s20, 0
      %p180 = por %p178, %p179
      %p181 = scmp.ne.s32.totalorder %s173, %s175
      %p182 = scmp.eq.s32.totalorder %s25, 1
      %p183 = por %p181, %p182
      %p184 = scmp.ne.s32.totalorder %s175, %s176
      %p185 = scmp.eq.s32.totalorder %s25, 0
      %p186 = por %p184, %p185
      %p187 = scmp.ne.s32.totalorder %s175, %s176
      %p188 = scmp.eq.s32.totalorder %s26, 1
      %p189 = por %p187, %p188
      %p191 = scmp.ne.s32.totalorder %s176, %s190
      %p192 = scmp.eq.s32.totalorder %s26, 0
      %p193 = por %p191, %p192
      %s195 = sadd.s32 %s194, 1
      %p198 = scmp.eq.s32.totalorder %s20, 1
      %p199 = scmp.ne.s32.totalorder %s194, %s196
      %p200 = scmp.eq.s32.totalorder %s20, 0
      %p201 = por %p199, %p200
      %p202 = scmp.ne.s32.totalorder %s194, %s196
      %p203 = scmp.eq.s32.totalorder %s25, 1
      %p204 = por %p202, %p203
      %p205 = scmp.ne.s32.totalorder %s196, %s197
      %p206 = scmp.eq.s32.totalorder %s25, 0
      %p207 = por %p205, %p206
      %p208 = scmp.ne.s32.totalorder %s196, %s197
      %p209 = scmp.eq.s32.totalorder %s26, 1
      %p210 = por %p208, %p209
      %p212 = scmp.ne.s32.totalorder %s197, %s211
      %p213 = scmp.eq.s32.totalorder %s26, 0
      %p214 = por %p212, %p213
      %s216 = sadd.s32 %s215, 1
      %p219 = scmp.eq.s32.totalorder %s20, 1
      %p220 = scmp.ne.s32.totalorder %s215, %s217
      %p221 = scmp.eq.s32.totalorder %s20, 0
      %p222 = por %p220, %p221
      %p223 = scmp.ne.s32.totalorder %s215, %s217
      %p224 = scmp.eq.s32.totalorder %s25, 1
      %p225 = por %p223, %p224
      %p226 = scmp.ne.s32.totalorder %s217, %s218
      %p227 = scmp.eq.s32.totalorder %s25, 0
      %p228 = por %p226, %p227
      %p229 = scmp.ne.s32.totalorder %s217, %s218
      %p230 = scmp.eq.s32.totalorder %s26, 1
      %p231 = por %p229, %p230
      %p233 = scmp.ne.s32.totalorder %s218, %s232
      %p234 = scmp.eq.s32.totalorder %s26, 0
      %p235 = por %p233, %p234
      %s237 = sadd.s32 %s236, 1
      %p240 = scmp.eq.s32.totalorder %s20, 1
      %p241 = scmp.ne.s32.totalorder %s236, %s238
      %p242 = scmp.eq.s32.totalorder %s20, 0
      %p243 = por %p241, %p242
      %p244 = scmp.ne.s32.totalorder %s236, %s238
      %p245 = scmp.eq.s32.totalorder %s25, 1
      %p246 = por %p244, %p245
      %p247 = scmp.ne.s32.totalorder %s238, %s239
      %p248 = scmp.eq.s32.totalorder %s25, 0
      %p249 = por %p247, %p248
      %p250 = scmp.ne.s32.totalorder %s238, %s239
      %p251 = scmp.eq.s32.totalorder %s26, 1
      %p252 = por %p250, %p251
      %p254 = scmp.ne.s32.totalorder %s239, %s253
      %p255 = scmp.eq.s32.totalorder %s26, 0
      %p256 = por %p254, %p255
      %s258 = sadd.s32 %s257, 1
      %p261 = scmp.eq.s32.totalorder %s20, 1
      %p262 = scmp.ne.s32.totalorder %s257, %s259
      %p263 = scmp.eq.s32.totalorder %s20, 0
      %p264 = por %p262, %p263
      %p265 = scmp.ne.s32.totalorder %s257, %s259
      %p266 = scmp.eq.s32.totalorder %s25, 1
      %p267 = por %p265, %p266
      %p268 = scmp.ne.s32.totalorder %s259, %s260
      %p269 = scmp.eq.s32.totalorder %s25, 0
      %p270 = por %p268, %p269
      %p271 = scmp.ne.s32.totalorder %s259, %s260
      %p272 = scmp.eq.s32.totalorder %s26, 1
      %p273 = por %p271, %p272
      %p275 = scmp.ne.s32.totalorder %s260, %s274
      %p276 = scmp.eq.s32.totalorder %s26, 0
      %p277 = por %p275, %p276
      %s278 = ssub.s32 %s27, %s39
      %s279 = ssub.s32 %s28, %s35
      %s280 = sor.u32 %s278, %s279
      %p281 = scmp.eq.s32.totalorder %s280, 0
      %s283 = sadd.s32 %s282, 1
      %s284 = scalar_select %p281, %s282, %s283
      %p287 = pneg %p281
      %p288 = scmp.eq.s32.totalorder %s20, 1
      %p289 = por %p287, %p288
      %p290 = scmp.ne.s32.totalorder %s282, %s285
      %p291 = scmp.eq.s32.totalorder %s20, 0
      %p292 = por %p290, %p291
      %p293 = scmp.ne.s32.totalorder %s282, %s285
      %p294 = scmp.eq.s32.totalorder %s25, 1
      %p295 = por %p293, %p294
      %p296 = scmp.ne.s32.totalorder %s285, %s286
      %p297 = scmp.eq.s32.totalorder %s25, 0
      %p298 = por %p296, %p297
      %p299 = scmp.ne.s32.totalorder %s285, %s286
      %p300 = scmp.eq.s32.totalorder %s26, 1
      %p301 = por %p299, %p300
      %p303 = scmp.ne.s32.totalorder %s286, %s302
      %p304 = scmp.eq.s32.totalorder %s26, 0
      %p305 = por %p303, %p304
      %p306 = scmp.le.s32.totalorder 1, %s20
      %p307 = scmp.lt.s32.totalorder %s20, 3
      %p308 = pnand %p306, %p307
      %p309 = pneg %p308
      // Predicated region
      $region9: #{tpu_custom_call.1} parent=5 // pred_check
        _
      $region10: #{tpu_custom_call.1} parent=5 // pred_check_branch
        %311 = sbr.rel (%p308) target = $region12
      $region11: #{tpu_custom_call.1} parent=5 // pred_region
        %s312 = ssub.s32 %s20, 1
        // Predicated region
        $region13: #{tpu_custom_call.1} parent=11 // pred_check
          %p313 = pneg %p81
        $region14: #{tpu_custom_call.1} parent=11 // pred_check_branch
          %315 = sbr.rel (%p313) target = $region16
        $region15: #{tpu_custom_call.1} parent=11 // pred_region
          _
        $region16: #{tpu_custom_call.1} parent=11 // pred_fallthru
          _
        // Predicated region
        $region17: #{tpu_custom_call.1} parent=11 // pred_check
          %p316 = pneg %p102
        $region18: #{tpu_custom_call.1} parent=11 // pred_check_branch
          %318 = sbr.rel (%p316) target = $region20
        $region19: #{tpu_custom_call.1} parent=11 // pred_region
          _
        $region20: #{tpu_custom_call.1} parent=11 // pred_fallthru
          _
        // Predicated region
        $region21: #{tpu_custom_call.1} parent=11 // pred_check
          %p319 = pneg %p123
        $region22: #{tpu_custom_call.1} parent=11 // pred_check_branch
          %321 = sbr.rel (%p319) target = $region24
        $region23: #{tpu_custom_call.1} parent=11 // pred_region
          _
        $region24: #{tpu_custom_call.1} parent=11 // pred_fallthru
          _
        // Predicated region
        $region25: #{tpu_custom_call.1} parent=11 // pred_check
          %p322 = pneg %p144
        $region26: #{tpu_custom_call.1} parent=11 // pred_check_branch
          %324 = sbr.rel (%p322) target = $region28
        $region27: #{tpu_custom_call.1} parent=11 // pred_region
          _
        $region28: #{tpu_custom_call.1} parent=11 // pred_fallthru
          _
        // Predicated region
        $region29: #{tpu_custom_call.1} parent=11 // pred_check
          %p325 = pneg %p165
        $region30: #{tpu_custom_call.1} parent=11 // pred_check_branch
          %327 = sbr.rel (%p325) target = $region32
        $region31: #{tpu_custom_call.1} parent=11 // pred_region
          _
        $region32: #{tpu_custom_call.1} parent=11 // pred_fallthru
          _
        // Predicated region
        $region33: #{tpu_custom_call.1} parent=11 // pred_check
          %p328 = pneg %p186
        $region34: #{tpu_custom_call.1} parent=11 // pred_check_branch
          %330 = sbr.rel (%p328) target = $region36
        $region35: #{tpu_custom_call.1} parent=11 // pred_region
          _
        $region36: #{tpu_custom_call.1} parent=11 // pred_fallthru
          _
        // Predicated region
        $region37: #{tpu_custom_call.1} parent=11 // pred_check
          %p331 = pneg %p207
        $region38: #{tpu_custom_call.1} parent=11 // pred_check_branch
          %333 = sbr.rel (%p331) target = $region40
        $region39: #{tpu_custom_call.1} parent=11 // pred_region
          _
        $region40: #{tpu_custom_call.1} parent=11 // pred_fallthru
          _
        // Predicated region
        $region41: #{tpu_custom_call.1} parent=11 // pred_check
          %p334 = pneg %p228
        $region42: #{tpu_custom_call.1} parent=11 // pred_check_branch
          %336 = sbr.rel (%p334) target = $region44
        $region43: #{tpu_custom_call.1} parent=11 // pred_region
          _
        $region44: #{tpu_custom_call.1} parent=11 // pred_fallthru
          _
        // Predicated region
        $region45: #{tpu_custom_call.1} parent=11 // pred_check
          %p337 = pneg %p249
        $region46: #{tpu_custom_call.1} parent=11 // pred_check_branch
          %339 = sbr.rel (%p337) target = $region48
        $region47: #{tpu_custom_call.1} parent=11 // pred_region
          _
        $region48: #{tpu_custom_call.1} parent=11 // pred_fallthru
          _
        // Predicated region
        $region49: #{tpu_custom_call.1} parent=11 // pred_check
          %p340 = pneg %p270
        $region50: #{tpu_custom_call.1} parent=11 // pred_check_branch
          %342 = sbr.rel (%p340) target = $region52
        $region51: #{tpu_custom_call.1} parent=11 // pred_region
          _
        $region52: #{tpu_custom_call.1} parent=11 // pred_fallthru
          _
      $region12: #{tpu_custom_call.1} parent=5 // pred_fallthru
        _
      %p343 = scmp.lt.s32.totalorder %s20, 2
      // Predicated region
      $region53: #{tpu_custom_call.1} parent=5 // pred_check
        %p344 = pneg %p343
      $region54: #{tpu_custom_call.1} parent=5 // pred_check_branch
        %346 = sbr.rel (%p344) target = $region56
      $region55: #{tpu_custom_call.1} parent=5 // pred_region
        // Predicated region
        $region57: #{tpu_custom_call.1} parent=55 // pred_check
          %p347 = pneg %p54
        $region58: #{tpu_custom_call.1} parent=55 // pred_check_branch
          %349 = sbr.rel (%p347) target = $region60
        $region59: #{tpu_custom_call.1} parent=55 // pred_region
          %s350 = smul.u32 2, %s28
          %p351 = scmp.lt.s32.totalorder %s27, 1
          %s352 = scalar_select %p351, %s27, 1
          %p353 = scmp.lt.s32.totalorder %s350, 1
          %s354 = scalar_select %p353, %s350, 1
          %s355 = smul.addr %s352, 2
          %s356 = sadd.s32 %s354, %s355
          %s357 = scalar_lea.vmem %s0, %s356
          %s358 = smul.u32 2, %s28
        $region60: #{tpu_custom_call.1} parent=55 // pred_fallthru
          _
      $region56: #{tpu_custom_call.1} parent=5 // pred_fallthru
        _
      %p359 = scmp.le.s32.totalorder 1, %s20
      %p360 = scmp.lt.s32.totalorder %s20, 3
      %p361 = pnand %p359, %p360
      %p362 = pneg %p361
      // Predicated region
      $region61: #{tpu_custom_call.1} parent=5 // pred_check
        _
      $region62: #{tpu_custom_call.1} parent=5 // pred_check_branch
        %364 = sbr.rel (%p361) target = $region64
      $region63: #{tpu_custom_call.1} parent=5 // pred_region
        %s365 = ssub.s32 %s20, 1
        %s366 = smul.u32 2, %s30
        %p367 = scmp.lt.s32.totalorder %s29, 1
        %s368 = scalar_select %p367, %s29, 1
        %p369 = scmp.lt.s32.totalorder %s366, 1
        %s370 = scalar_select %p369, %s366, 1
        %s371 = smul.addr %s368, 2
        %s372 = sadd.s32 %s370, %s371
        %s373 = scalar_lea.vmem %s0, %s372
        %p374 = pneg %p60
        %p375 = pneg %p57
        %p376 = pneg %p81
        %p377 = pneg %p78
        %p378 = pneg %p102
        %p379 = pneg %p99
        %p380 = pneg %p123
        %p381 = pneg %p120
        %p382 = pneg %p144
        %p383 = pneg %p141
        %p384 = pneg %p165
        %p385 = pneg %p162
        %p386 = pneg %p186
        %p387 = pneg %p183
        %p388 = pneg %p207
        %p389 = pneg %p204
        %p390 = pneg %p228
        %p391 = pneg %p225
        %p392 = pneg %p249
        %p393 = pneg %p246
        %p394 = pneg %p270
        %p395 = pneg %p267
        %p396 = pneg %p298
        %p397 = pneg %p295
        %s398 = sand.u32 %s285, 1
        %s399 = scalar_lea.sflag [#allocation3], %s398
        %s400 = sand.u32 %s285, 1
        %s401 = smul.addr %s400, 32
        %s402 = scalar_lea.vmem [#allocation2], %s401
        %s403 = smul.u32 2, %s30
        %p404 = scmp.lt.s32.totalorder %s29, 1
        %s405 = scalar_select %p404, %s29, 1
        %p406 = scmp.lt.s32.totalorder %s403, 1
        %s407 = scalar_select %p406, %s403, 1
        %s408 = smul.addr %s405, 2
        %s409 = sadd.s32 %s407, %s408
        %s410 = scalar_lea.vmem %s0, %s409
        %s411 = smul.u32 2, %s30
        %s412 = smul.u32 2, %s30
        %v413 = vld [vmem:[%s410] sm:$0x3]
        %v414 = vld [vmem:[%s1] sm:$0xff]
        %v415 = vld [vmem:[%s1 + $0x8] sm:$0xff]
        %v416 = vld [vmem:[%s1 + $0x10] sm:$0xff]
        %v417 = vld [vmem:[%s1 + $0x18] sm:$0xff]
        %v418 = vld [vmem:[%s1 + $0x20] sm:$0xff]
        %v419 = vld [vmem:[%s1 + $0x28] sm:$0xff]
        %v420 = vld [vmem:[%s1 + $0x30] sm:$0xff]
        %v421 = vld [vmem:[%s1 + $0x38] sm:$0xff]
        %423 = vset.pattern.permute.xlu0 0
        %424 = vperm.xlu0 %423, %v414
        %v425 = vpop.permute.xlu0 %424
        %428 = vset.pattern.permute.xlu0 0
        %429 = vperm.xlu0 %428, %v415
        %v430 = vpop.permute.xlu0 %429
        %433 = vset.pattern.permute.xlu0 0
        %434 = vperm.xlu0 %433, %v416
        %v435 = vpop.permute.xlu0 %434
        %438 = vset.pattern.permute.xlu0 0
        %439 = vperm.xlu0 %438, %v417
        %v440 = vpop.permute.xlu0 %439
        %443 = vset.pattern.permute.xlu0 0
        %444 = vperm.xlu0 %443, %v418
        %v445 = vpop.permute.xlu0 %444
        %448 = vset.pattern.permute.xlu0 0
        %449 = vperm.xlu0 %448, %v419
        %v450 = vpop.permute.xlu0 %449
        %453 = vset.pattern.permute.xlu0 0
        %454 = vperm.xlu0 %453, %v420
        %v455 = vpop.permute.xlu0 %454
        %458 = vset.pattern.permute.xlu0 0
        %459 = vperm.xlu0 %458, %v421
        %v460 = vpop.permute.xlu0 %459
        %v463 = vlaneseq
        %v464 = vshrl.u32 %v463, 7
        %v465 = vsub.s32 0, %v464
        %v466 = vrot.slane %v413, %v465
        %v467 = vlaneseq
        %v468 = vshrl.u32 %v467, 7
        %v469 = vsub.s32 1, %v468
        %v470 = vrot.slane %v413, %v469
        %v473 = vmul.f32 %v425, %v466
        %v474 = vmul.f32 %v425, %v470
        %v475 = vmul.f32 %v430, %v466
        %v476 = vmul.f32 %v430, %v470
        %v477 = vmul.f32 %v435, %v466
        %v478 = vmul.f32 %v435, %v470
        %v479 = vmul.f32 %v440, %v466
        %v480 = vmul.f32 %v440, %v470
        %v481 = vmul.f32 %v445, %v466
        %v482 = vmul.f32 %v445, %v470
        %v483 = vmul.f32 %v450, %v466
        %v484 = vmul.f32 %v450, %v470
        %v485 = vmul.f32 %v455, %v466
        %v486 = vmul.f32 %v455, %v470
        %v487 = vmul.f32 %v460, %v466
        %v488 = vmul.f32 %v460, %v470
        %v489 = vld [vmem:[%s2] sm:$0xff]
        %v490 = vld [vmem:[%s2 + $0x8] sm:$0xff]
        %v491 = vld [vmem:[%s2 + $0x10] sm:$0xff]
        %v492 = vld [vmem:[%s2 + $0x18] sm:$0xff]
        %v493 = vld [vmem:[%s2 + $0x20] sm:$0xff]
        %v494 = vld [vmem:[%s2 + $0x28] sm:$0xff]
        %v495 = vld [vmem:[%s2 + $0x30] sm:$0xff]
        %v496 = vld [vmem:[%s2 + $0x38] sm:$0xff]
        %498 = vset.pattern.permute.xlu0 0
        %499 = vperm.xlu0 %498, %v489
        %v500 = vpop.permute.xlu0 %499
        %503 = vset.pattern.permute.xlu0 0
        %504 = vperm.xlu0 %503, %v490
        %v505 = vpop.permute.xlu0 %504
        %508 = vset.pattern.permute.xlu0 0
        %509 = vperm.xlu0 %508, %v491
        %v510 = vpop.permute.xlu0 %509
        %513 = vset.pattern.permute.xlu0 0
        %514 = vperm.xlu0 %513, %v492
        %v515 = vpop.permute.xlu0 %514
        %518 = vset.pattern.permute.xlu0 0
        %519 = vperm.xlu0 %518, %v493
        %v520 = vpop.permute.xlu0 %519
        %523 = vset.pattern.permute.xlu0 0
        %524 = vperm.xlu0 %523, %v494
        %v525 = vpop.permute.xlu0 %524
        %528 = vset.pattern.permute.xlu0 0
        %529 = vperm.xlu0 %528, %v495
        %v530 = vpop.permute.xlu0 %529
        %533 = vset.pattern.permute.xlu0 0
        %534 = vperm.xlu0 %533, %v496
        %v535 = vpop.permute.xlu0 %534
        %v537 = vadd.f32 %v473, %v500
        %v538 = vadd.f32 %v474, %v500
        %v539 = vadd.f32 %v475, %v505
        %v540 = vadd.f32 %v476, %v505
        %v541 = vadd.f32 %v477, %v510
        %v542 = vadd.f32 %v478, %v510
        %v543 = vadd.f32 %v479, %v515
        %v544 = vadd.f32 %v480, %v515
        %v545 = vadd.f32 %v481, %v520
        %v546 = vadd.f32 %v482, %v520
        %v547 = vadd.f32 %v483, %v525
        %v548 = vadd.f32 %v484, %v525
        %v549 = vadd.f32 %v485, %v530
        %v550 = vadd.f32 %v486, %v530
        %v551 = vadd.f32 %v487, %v535
        %v552 = vadd.f32 %v488, %v535
        %v553 = vmax.f32 %v537, 0.0
        %v554 = vmax.f32 %v538, 0.0
        %v555 = vmax.f32 %v539, 0.0
        %v556 = vmax.f32 %v540, 0.0
        %v557 = vmax.f32 %v541, 0.0
        %v558 = vmax.f32 %v542, 0.0
        %v559 = vmax.f32 %v543, 0.0
        %v560 = vmax.f32 %v544, 0.0
        %v561 = vmax.f32 %v545, 0.0
        %v562 = vmax.f32 %v546, 0.0
        %v563 = vmax.f32 %v547, 0.0
        %v564 = vmax.f32 %v548, 0.0
        %v565 = vmax.f32 %v549, 0.0
        %v566 = vmax.f32 %v550, 0.0
        %v567 = vmax.f32 %v551, 0.0
        %v568 = vmax.f32 %v552, 0.0
        %v569 = vld [vmem:[%s3] sm:$0xff]
        %v570 = vld [vmem:[%s3 + $0x8] sm:$0xff]
        %v571 = vld [vmem:[%s3 + $0x10] sm:$0xff]
        %v572 = vld [vmem:[%s3 + $0x18] sm:$0xff]
        %v573 = vld [vmem:[%s3 + $0x20] sm:$0xff]
        %v574 = vld [vmem:[%s3 + $0x28] sm:$0xff]
        %v575 = vld [vmem:[%s3 + $0x30] sm:$0xff]
        %v576 = vld [vmem:[%s3 + $0x38] sm:$0xff]
        %v577 = vld [vmem:[%s4] sm:$0xff]
        %v578 = vld [vmem:[%s4 + $0x8] sm:$0xff]
        %v579 = vld [vmem:[%s4 + $0x10] sm:$0xff]
        %v580 = vld [vmem:[%s4 + $0x18] sm:$0xff]
        %v581 = vld [vmem:[%s4 + $0x20] sm:$0xff]
        %v582 = vld [vmem:[%s4 + $0x28] sm:$0xff]
        %v583 = vld [vmem:[%s4 + $0x30] sm:$0xff]
        %v584 = vld [vmem:[%s4 + $0x38] sm:$0xff]
        %586 = vset.pattern.permute.xlu0 0
        %587 = vperm.xlu0 %586, %v577
        %v588 = vpop.permute.xlu0 %587
        %591 = vset.pattern.permute.xlu0 0
        %592 = vperm.xlu0 %591, %v578
        %v593 = vpop.permute.xlu0 %592
        %596 = vset.pattern.permute.xlu0 0
        %597 = vperm.xlu0 %596, %v579
        %v598 = vpop.permute.xlu0 %597
        %601 = vset.pattern.permute.xlu0 0
        %602 = vperm.xlu0 %601, %v580
        %v603 = vpop.permute.xlu0 %602
        %606 = vset.pattern.permute.xlu0 0
        %607 = vperm.xlu0 %606, %v581
        %v608 = vpop.permute.xlu0 %607
        %611 = vset.pattern.permute.xlu0 0
        %612 = vperm.xlu0 %611, %v582
        %v613 = vpop.permute.xlu0 %612
        %616 = vset.pattern.permute.xlu0 0
        %617 = vperm.xlu0 %616, %v583
        %v618 = vpop.permute.xlu0 %617
        %621 = vset.pattern.permute.xlu0 0
        %622 = vperm.xlu0 %621, %v584
        %v623 = vpop.permute.xlu0 %622
        %vm625 = vcmask 523264
        %v627 = vsel %vm625, %v569, 0
        %v630 = vsel %vm625, %v570, 0
        %v633 = vsel %vm625, %v571, 0
        %v636 = vsel %vm625, %v572, 0
        %v639 = vsel %vm625, %v573, 0
        %v642 = vsel %vm625, %v574, 0
        %v645 = vsel %vm625, %v575, 0
        %v648 = vsel %vm625, %v576, 0
        %650 = vmatprep.subr.mxu0 0.0
        %651 = vmatpush1.msra.mxu0 0.0
        %652 = vmatprep.subr.mxu0 0.0
        %653 = vmatpush1.msra.mxu0 0.0
        %654 = vmatprep.subr.mxu0 0.0
        %655 = vmatpush1.msra.mxu0 0.0
        %656 = vmatprep.subr.mxu0 0.0
        %657 = vmatpush1.msra.mxu0 0.0
        %658 = vmatprep.subr.mxu0 0.0
        %659 = vmatpush1.msra.mxu0 0.0
        %660 = vmatprep.subr.mxu0 0.0
        %661 = vmatpush1.msra.mxu0 0.0
        %662 = vmatprep.subr.mxu0 0.0
        %663 = vmatpush1.msra.mxu0 0.0
        %664 = vmatprep.subr.mxu0 0.0
        %665 = vmatpush1.msra.mxu0 0.0
        %666 = vmatprep.subr.mxu0 %v568
        %667 = vmatpush1.msra.mxu0 %v567
        %668 = vmatprep.subr.mxu0 %v566
        %669 = vmatpush1.msra.mxu0 %v565
        %670 = vmatprep.subr.mxu0 %v564
        %671 = vmatpush1.msra.mxu0 %v563
        %672 = vmatprep.subr.mxu0 %v562
        %673 = vmatpush1.msra.mxu0 %v561
        %674 = vmatprep.subr.mxu0 %v560
        %675 = vmatpush1.msra.mxu0 %v559
        %676 = vmatprep.subr.mxu0 %v558
        %677 = vmatpush1.msra.mxu0 %v557
        %678 = vmatprep.subr.mxu0 %v556
        %679 = vmatpush1.msra.mxu0 %v555
        %680 = vmatprep.subr.mxu0 %v554
        %681 = vmatpush1.msra.mxu0 %v553
        %682 = vmatprep.subr.mxu0 0.0
        %683 = vmatpush2.msra.mxu0 0.0
        %684 = vmatprep.subr.mxu0 0.0
        %685 = vmatpush2.msra.mxu0 0.0
        %686 = vmatprep.subr.mxu0 0.0
        %687 = vmatpush2.msra.mxu0 0.0
        %688 = vmatprep.subr.mxu0 0.0
        %689 = vmatpush2.msra.mxu0 0.0
        %690 = vmatprep.subr.mxu0 0.0
        %691 = vmatpush2.msra.mxu0 0.0
        %692 = vmatprep.subr.mxu0 0.0
        %693 = vmatpush2.msra.mxu0 0.0
        %694 = vmatprep.subr.mxu0 0.0
        %695 = vmatpush2.msra.mxu0 0.0
        %696 = vmatprep.subr.mxu0 0.0
        %697 = vmatpush2.msra.mxu0 0.0
        %698 = vmatprep.subr.mxu0 0.0
        %699 = vmatpush2.msra.mxu0 0.0
        %700 = vmatprep.subr.mxu0 0.0
        %701 = vmatpush2.msra.mxu0 0.0
        %702 = vmatprep.subr.mxu0 0.0
        %703 = vmatpush2.msra.mxu0 0.0
        %704 = vmatprep.subr.mxu0 0.0
        %705 = vmatpush2.msra.mxu0 0.0
        %706 = vmatprep.subr.mxu0 0.0
        %707 = vmatpush2.msra.mxu0 0.0
        %708 = vmatprep.subr.mxu0 0.0
        %709 = vmatpush2.msra.mxu0 0.0
        %710 = vmatprep.subr.mxu0 0.0
        %711 = vmatpush2.msra.mxu0 0.0
        %712 = vmatprep.subr.mxu0 0.0
        %713 = vmatpush2.msra.mxu0 0.0
        %714 = vmatprep.mubr.f32.mxu0 0.0
        %715 = vmatmul.mubr.f32.gmra.mxu0 %v627
        %v716 = vpop.f32.mrf.mxu0
        %v717 = vadd.f32 %v588, %v716
        %v718 = vpop.f32.mrf.mxu0
        %v719 = vadd.f32 %v588, %v718
        %720 = vmatprep.mubr.f32.mxu0 0.0
        %721 = vmatmul.mubr.f32.gmra.mxu0 %v630
        %v722 = vpop.f32.mrf.mxu0
        %v723 = vadd.f32 %v593, %v722
        %v724 = vpop.f32.mrf.mxu0
        %v725 = vadd.f32 %v593, %v724
        %726 = vmatprep.mubr.f32.mxu0 0.0
        %727 = vmatmul.mubr.f32.gmra.mxu0 %v633
        %v728 = vpop.f32.mrf.mxu0
        %v729 = vadd.f32 %v598, %v728
        %v730 = vpop.f32.mrf.mxu0
        %v731 = vadd.f32 %v598, %v730
        %732 = vmatprep.mubr.f32.mxu0 0.0
        %733 = vmatmul.mubr.f32.gmra.mxu0 %v636
        %v734 = vpop.f32.mrf.mxu0
        %v735 = vadd.f32 %v603, %v734
        %v736 = vpop.f32.mrf.mxu0
        %v737 = vadd.f32 %v603, %v736
        %738 = vmatprep.mubr.f32.mxu0 0.0
        %739 = vmatmul.mubr.f32.gmra.mxu0 %v639
        %v740 = vpop.f32.mrf.mxu0
        %v741 = vadd.f32 %v608, %v740
        %v742 = vpop.f32.mrf.mxu0
        %v743 = vadd.f32 %v608, %v742
        %744 = vmatprep.mubr.f32.mxu0 0.0
        %745 = vmatmul.mubr.f32.gmra.mxu0 %v642
        %v746 = vpop.f32.mrf.mxu0
        %v747 = vadd.f32 %v613, %v746
        %v748 = vpop.f32.mrf.mxu0
        %v749 = vadd.f32 %v613, %v748
        %750 = vmatprep.mubr.f32.mxu0 0.0
        %751 = vmatmul.mubr.f32.gmra.mxu0 %v645
        %v752 = vpop.f32.mrf.mxu0
        %v753 = vadd.f32 %v618, %v752
        %v754 = vpop.f32.mrf.mxu0
        %v755 = vadd.f32 %v618, %v754
        %756 = vmatprep.mubr.f32.mxu0 0.0
        %757 = vmatmul.mubr.f32.gmra.mxu0 %v648
        %v758 = vpop.f32.mrf.mxu0
        %v759 = vadd.f32 %v623, %v758
        %v760 = vpop.f32.mrf.mxu0
        %v761 = vadd.f32 %v623, %v760
        %762 = vdwg.mxu0
        %v763 = vmax.f32 %v717, 0.0
        %v764 = vmax.f32 %v719, 0.0
        %v765 = vmax.f32 %v723, 0.0
        %v766 = vmax.f32 %v725, 0.0
        %v767 = vmax.f32 %v729, 0.0
        %v768 = vmax.f32 %v731, 0.0
        %v769 = vmax.f32 %v735, 0.0
        %v770 = vmax.f32 %v737, 0.0
        %v771 = vmax.f32 %v741, 0.0
        %v772 = vmax.f32 %v743, 0.0
        %v773 = vmax.f32 %v747, 0.0
        %v774 = vmax.f32 %v749, 0.0
        %v775 = vmax.f32 %v753, 0.0
        %v776 = vmax.f32 %v755, 0.0
        %v777 = vmax.f32 %v759, 0.0
        %v778 = vmax.f32 %v761, 0.0
        %v779 = vld [vmem:[%s5] sm:$0xff]
        %v780 = vld [vmem:[%s5 + $0x8] sm:$0xff]
        %v781 = vld [vmem:[%s5 + $0x10] sm:$0xff]
        %v782 = vld [vmem:[%s5 + $0x18] sm:$0xff]
        %v783 = vld [vmem:[%s5 + $0x20] sm:$0xff]
        %v784 = vld [vmem:[%s5 + $0x28] sm:$0xff]
        %v785 = vld [vmem:[%s5 + $0x30] sm:$0xff]
        %v786 = vld [vmem:[%s5 + $0x38] sm:$0xff]
        %v787 = vld [vmem:[%s6] sm:$0xff]
        %v788 = vld [vmem:[%s6 + $0x8] sm:$0xff]
        %v789 = vld [vmem:[%s6 + $0x10] sm:$0xff]
        %v790 = vld [vmem:[%s6 + $0x18] sm:$0xff]
        %v791 = vld [vmem:[%s6 + $0x20] sm:$0xff]
        %v792 = vld [vmem:[%s6 + $0x28] sm:$0xff]
        %v793 = vld [vmem:[%s6 + $0x30] sm:$0xff]
        %v794 = vld [vmem:[%s6 + $0x38] sm:$0xff]
        %796 = vset.pattern.permute.xlu0 0
        %797 = vperm.xlu0 %796, %v787
        %v798 = vpop.permute.xlu0 %797
        %801 = vset.pattern.permute.xlu0 0
        %802 = vperm.xlu0 %801, %v788
        %v803 = vpop.permute.xlu0 %802
        %806 = vset.pattern.permute.xlu0 0
        %807 = vperm.xlu0 %806, %v789
        %v808 = vpop.permute.xlu0 %807
        %811 = vset.pattern.permute.xlu0 0
        %812 = vperm.xlu0 %811, %v790
        %v813 = vpop.permute.xlu0 %812
        %816 = vset.pattern.permute.xlu0 0
        %817 = vperm.xlu0 %816, %v791
        %v818 = vpop.permute.xlu0 %817
        %821 = vset.pattern.permute.xlu0 0
        %822 = vperm.xlu0 %821, %v792
        %v823 = vpop.permute.xlu0 %822
        %826 = vset.pattern.permute.xlu0 0
        %827 = vperm.xlu0 %826, %v793
        %v828 = vpop.permute.xlu0 %827
        %831 = vset.pattern.permute.xlu0 0
        %832 = vperm.xlu0 %831, %v794
        %v833 = vpop.permute.xlu0 %832
        %v836 = vsel %vm625, %v779, 0
        %v839 = vsel %vm625, %v780, 0
        %v842 = vsel %vm625, %v781, 0
        %v845 = vsel %vm625, %v782, 0
        %v848 = vsel %vm625, %v783, 0
        %v851 = vsel %vm625, %v784, 0
        %v854 = vsel %vm625, %v785, 0
        %v857 = vsel %vm625, %v786, 0
        %859 = vmatprep.subr.mxu0 0.0
        %860 = vmatpush1.msra.mxu0 0.0
        %861 = vmatprep.subr.mxu0 0.0
        %862 = vmatpush1.msra.mxu0 0.0
        %863 = vmatprep.subr.mxu0 0.0
        %864 = vmatpush1.msra.mxu0 0.0
        %865 = vmatprep.subr.mxu0 0.0
        %866 = vmatpush1.msra.mxu0 0.0
        %867 = vmatprep.subr.mxu0 0.0
        %868 = vmatpush1.msra.mxu0 0.0
        %869 = vmatprep.subr.mxu0 0.0
        %870 = vmatpush1.msra.mxu0 0.0
        %871 = vmatprep.subr.mxu0 0.0
        %872 = vmatpush1.msra.mxu0 0.0
        %873 = vmatprep.subr.mxu0 0.0
        %874 = vmatpush1.msra.mxu0 0.0
        %875 = vmatprep.subr.mxu0 %v778
        %876 = vmatpush1.msra.mxu0 %v777
        %877 = vmatprep.subr.mxu0 %v776
        %878 = vmatpush1.msra.mxu0 %v775
        %879 = vmatprep.subr.mxu0 %v774
        %880 = vmatpush1.msra.mxu0 %v773
        %881 = vmatprep.subr.mxu0 %v772
        %882 = vmatpush1.msra.mxu0 %v771
        %883 = vmatprep.subr.mxu0 %v770
        %884 = vmatpush1.msra.mxu0 %v769
        %885 = vmatprep.subr.mxu0 %v768
        %886 = vmatpush1.msra.mxu0 %v767
        %887 = vmatprep.subr.mxu0 %v766
        %888 = vmatpush1.msra.mxu0 %v765
        %889 = vmatprep.subr.mxu0 %v764
        %890 = vmatpush1.msra.mxu0 %v763
        %891 = vmatprep.subr.mxu0 0.0
        %892 = vmatpush2.msra.mxu0 0.0
        %893 = vmatprep.subr.mxu0 0.0
        %894 = vmatpush2.msra.mxu0 0.0
        %895 = vmatprep.subr.mxu0 0.0
        %896 = vmatpush2.msra.mxu0 0.0
        %897 = vmatprep.subr.mxu0 0.0
        %898 = vmatpush2.msra.mxu0 0.0
        %899 = vmatprep.subr.mxu0 0.0
        %900 = vmatpush2.msra.mxu0 0.0
        %901 = vmatprep.subr.mxu0 0.0
        %902 = vmatpush2.msra.mxu0 0.0
        %903 = vmatprep.subr.mxu0 0.0
        %904 = vmatpush2.msra.mxu0 0.0
        %905 = vmatprep.subr.mxu0 0.0
        %906 = vmatpush2.msra.mxu0 0.0
        %907 = vmatprep.subr.mxu0 0.0
        %908 = vmatpush2.msra.mxu0 0.0
        %909 = vmatprep.subr.mxu0 0.0
        %910 = vmatpush2.msra.mxu0 0.0
        %911 = vmatprep.subr.mxu0 0.0
        %912 = vmatpush2.msra.mxu0 0.0
        %913 = vmatprep.subr.mxu0 0.0
        %914 = vmatpush2.msra.mxu0 0.0
        %915 = vmatprep.subr.mxu0 0.0
        %916 = vmatpush2.msra.mxu0 0.0
        %917 = vmatprep.subr.mxu0 0.0
        %918 = vmatpush2.msra.mxu0 0.0
        %919 = vmatprep.subr.mxu0 0.0
        %920 = vmatpush2.msra.mxu0 0.0
        %921 = vmatprep.subr.mxu0 0.0
        %922 = vmatpush2.msra.mxu0 0.0
        %923 = vmatprep.mubr.f32.mxu0 0.0
        %924 = vmatmul.mubr.f32.gmra.mxu0 %v836
        %v925 = vpop.f32.mrf.mxu0
        %v926 = vadd.f32 %v798, %v925
        %v927 = vpop.f32.mrf.mxu0
        %v928 = vadd.f32 %v798, %v927
        %929 = vmatprep.mubr.f32.mxu0 0.0
        %930 = vmatmul.mubr.f32.gmra.mxu0 %v839
        %v931 = vpop.f32.mrf.mxu0
        %v932 = vadd.f32 %v803, %v931
        %v933 = vpop.f32.mrf.mxu0
        %v934 = vadd.f32 %v803, %v933
        %935 = vmatprep.mubr.f32.mxu0 0.0
        %936 = vmatmul.mubr.f32.gmra.mxu0 %v842
        %v937 = vpop.f32.mrf.mxu0
        %v938 = vadd.f32 %v808, %v937
        %v939 = vpop.f32.mrf.mxu0
        %v940 = vadd.f32 %v808, %v939
        %941 = vmatprep.mubr.f32.mxu0 0.0
        %942 = vmatmul.mubr.f32.gmra.mxu0 %v845
        %v943 = vpop.f32.mrf.mxu0
        %v944 = vadd.f32 %v813, %v943
        %v945 = vpop.f32.mrf.mxu0
        %v946 = vadd.f32 %v813, %v945
        %947 = vmatprep.mubr.f32.mxu0 0.0
        %948 = vmatmul.mubr.f32.gmra.mxu0 %v848
        %v949 = vpop.f32.mrf.mxu0
        %v950 = vadd.f32 %v818, %v949
        %v951 = vpop.f32.mrf.mxu0
        %v952 = vadd.f32 %v818, %v951
        %953 = vmatprep.mubr.f32.mxu0 0.0
        %954 = vmatmul.mubr.f32.gmra.mxu0 %v851
        %v955 = vpop.f32.mrf.mxu0
        %v956 = vadd.f32 %v823, %v955
        %v957 = vpop.f32.mrf.mxu0
        %v958 = vadd.f32 %v823, %v957
        %959 = vmatprep.mubr.f32.mxu0 0.0
        %960 = vmatmul.mubr.f32.gmra.mxu0 %v854
        %v961 = vpop.f32.mrf.mxu0
        %v962 = vadd.f32 %v828, %v961
        %v963 = vpop.f32.mrf.mxu0
        %v964 = vadd.f32 %v828, %v963
        %965 = vmatprep.mubr.f32.mxu0 0.0
        %966 = vmatmul.mubr.f32.gmra.mxu0 %v857
        %v967 = vpop.f32.mrf.mxu0
        %v968 = vadd.f32 %v833, %v967
        %v969 = vpop.f32.mrf.mxu0
        %v970 = vadd.f32 %v833, %v969
        %971 = vdwg.mxu0
        %v972 = vmax.f32 %v926, 0.0
        %v973 = vmax.f32 %v928, 0.0
        %v974 = vmax.f32 %v932, 0.0
        %v975 = vmax.f32 %v934, 0.0
        %v976 = vmax.f32 %v938, 0.0
        %v977 = vmax.f32 %v940, 0.0
        %v978 = vmax.f32 %v944, 0.0
        %v979 = vmax.f32 %v946, 0.0
        %v980 = vmax.f32 %v950, 0.0
        %v981 = vmax.f32 %v952, 0.0
        %v982 = vmax.f32 %v956, 0.0
        %v983 = vmax.f32 %v958, 0.0
        %v984 = vmax.f32 %v962, 0.0
        %v985 = vmax.f32 %v964, 0.0
        %v986 = vmax.f32 %v968, 0.0
        %v987 = vmax.f32 %v970, 0.0
        %v988 = vld [vmem:[%s7] sm:$0xff]
        %v989 = vld [vmem:[%s7 + $0x8] sm:$0xff]
        %v990 = vld [vmem:[%s7 + $0x10] sm:$0xff]
        %v991 = vld [vmem:[%s7 + $0x18] sm:$0xff]
        %v992 = vld [vmem:[%s7 + $0x20] sm:$0xff]
        %v993 = vld [vmem:[%s7 + $0x28] sm:$0xff]
        %v994 = vld [vmem:[%s7 + $0x30] sm:$0xff]
        %v995 = vld [vmem:[%s7 + $0x38] sm:$0xff]
        %v996 = vld [vmem:[%s8] sm:$0xff]
        %v997 = vld [vmem:[%s8 + $0x8] sm:$0xff]
        %v998 = vld [vmem:[%s8 + $0x10] sm:$0xff]
        %v999 = vld [vmem:[%s8 + $0x18] sm:$0xff]
        %v1000 = vld [vmem:[%s8 + $0x20] sm:$0xff]
        %v1001 = vld [vmem:[%s8 + $0x28] sm:$0xff]
        %v1002 = vld [vmem:[%s8 + $0x30] sm:$0xff]
        %v1003 = vld [vmem:[%s8 + $0x38] sm:$0xff]
        %1005 = vset.pattern.permute.xlu0 0
        %1006 = vperm.xlu0 %1005, %v996
        %v1007 = vpop.permute.xlu0 %1006
        %1010 = vset.pattern.permute.xlu0 0
        %1011 = vperm.xlu0 %1010, %v997
        %v1012 = vpop.permute.xlu0 %1011
        %1015 = vset.pattern.permute.xlu0 0
        %1016 = vperm.xlu0 %1015, %v998
        %v1017 = vpop.permute.xlu0 %1016
        %1020 = vset.pattern.permute.xlu0 0
        %1021 = vperm.xlu0 %1020, %v999
        %v1022 = vpop.permute.xlu0 %1021
        %1025 = vset.pattern.permute.xlu0 0
        %1026 = vperm.xlu0 %1025, %v1000
        %v1027 = vpop.permute.xlu0 %1026
        %1030 = vset.pattern.permute.xlu0 0
        %1031 = vperm.xlu0 %1030, %v1001
        %v1032 = vpop.permute.xlu0 %1031
        %1035 = vset.pattern.permute.xlu0 0
        %1036 = vperm.xlu0 %1035, %v1002
        %v1037 = vpop.permute.xlu0 %1036
        %1040 = vset.pattern.permute.xlu0 0
        %1041 = vperm.xlu0 %1040, %v1003
        %v1042 = vpop.permute.xlu0 %1041
        %v1045 = vsel %vm625, %v988, 0
        %v1048 = vsel %vm625, %v989, 0
        %v1051 = vsel %vm625, %v990, 0
        %v1054 = vsel %vm625, %v991, 0
        %v1057 = vsel %vm625, %v992, 0
        %v1060 = vsel %vm625, %v993, 0
        %v1063 = vsel %vm625, %v994, 0
        %v1066 = vsel %vm625, %v995, 0
        %1068 = vmatprep.subr.mxu0 0.0
        %1069 = vmatpush1.msra.mxu0 0.0
        %1070 = vmatprep.subr.mxu0 0.0
        %1071 = vmatpush1.msra.mxu0 0.0
        %1072 = vmatprep.subr.mxu0 0.0
        %1073 = vmatpush1.msra.mxu0 0.0
        %1074 = vmatprep.subr.mxu0 0.0
        %1075 = vmatpush1.msra.mxu0 0.0
        %1076 = vmatprep.subr.mxu0 0.0
        %1077 = vmatpush1.msra.mxu0 0.0
        %1078 = vmatprep.subr.mxu0 0.0
        %1079 = vmatpush1.msra.mxu0 0.0
        %1080 = vmatprep.subr.mxu0 0.0
        %1081 = vmatpush1.msra.mxu0 0.0
        %1082 = vmatprep.subr.mxu0 0.0
        %1083 = vmatpush1.msra.mxu0 0.0
        %1084 = vmatprep.subr.mxu0 %v987
        %1085 = vmatpush1.msra.mxu0 %v986
        %1086 = vmatprep.subr.mxu0 %v985
        %1087 = vmatpush1.msra.mxu0 %v984
        %1088 = vmatprep.subr.mxu0 %v983
        %1089 = vmatpush1.msra.mxu0 %v982
        %1090 = vmatprep.subr.mxu0 %v981
        %1091 = vmatpush1.msra.mxu0 %v980
        %1092 = vmatprep.subr.mxu0 %v979
        %1093 = vmatpush1.msra.mxu0 %v978
        %1094 = vmatprep.subr.mxu0 %v977
        %1095 = vmatpush1.msra.mxu0 %v976
        %1096 = vmatprep.subr.mxu0 %v975
        %1097 = vmatpush1.msra.mxu0 %v974
        %1098 = vmatprep.subr.mxu0 %v973
        %1099 = vmatpush1.msra.mxu0 %v972
        %1100 = vmatprep.subr.mxu0 0.0
        %1101 = vmatpush2.msra.mxu0 0.0
        %1102 = vmatprep.subr.mxu0 0.0
        %1103 = vmatpush2.msra.mxu0 0.0
        %1104 = vmatprep.subr.mxu0 0.0
        %1105 = vmatpush2.msra.mxu0 0.0
        %1106 = vmatprep.subr.mxu0 0.0
        %1107 = vmatpush2.msra.mxu0 0.0
        %1108 = vmatprep.subr.mxu0 0.0
        %1109 = vmatpush2.msra.mxu0 0.0
        %1110 = vmatprep.subr.mxu0 0.0
        %1111 = vmatpush2.msra.mxu0 0.0
        %1112 = vmatprep.subr.mxu0 0.0
        %1113 = vmatpush2.msra.mxu0 0.0
        %1114 = vmatprep.subr.mxu0 0.0
        %1115 = vmatpush2.msra.mxu0 0.0
        %1116 = vmatprep.subr.mxu0 0.0
        %1117 = vmatpush2.msra.mxu0 0.0
        %1118 = vmatprep.subr.mxu0 0.0
        %1119 = vmatpush2.msra.mxu0 0.0
        %1120 = vmatprep.subr.mxu0 0.0
        %1121 = vmatpush2.msra.mxu0 0.0
        %1122 = vmatprep.subr.mxu0 0.0
        %1123 = vmatpush2.msra.mxu0 0.0
        %1124 = vmatprep.subr.mxu0 0.0
        %1125 = vmatpush2.msra.mxu0 0.0
        %1126 = vmatprep.subr.mxu0 0.0
        %1127 = vmatpush2.msra.mxu0 0.0
        %1128 = vmatprep.subr.mxu0 0.0
        %1129 = vmatpush2.msra.mxu0 0.0
        %1130 = vmatprep.subr.mxu0 0.0
        %1131 = vmatpush2.msra.mxu0 0.0
        %1132 = vmatprep.mubr.f32.mxu0 0.0
        %1133 = vmatmul.mubr.f32.gmra.mxu0 %v1045
        %v1134 = vpop.f32.mrf.mxu0
        %v1135 = vadd.f32 %v1007, %v1134
        %v1136 = vpop.f32.mrf.mxu0
        %v1137 = vadd.f32 %v1007, %v1136
        %1138 = vmatprep.mubr.f32.mxu0 0.0
        %1139 = vmatmul.mubr.f32.gmra.mxu0 %v1048
        %v1140 = vpop.f32.mrf.mxu0
        %v1141 = vadd.f32 %v1012, %v1140
        %v1142 = vpop.f32.mrf.mxu0
        %v1143 = vadd.f32 %v1012, %v1142
        %1144 = vmatprep.mubr.f32.mxu0 0.0
        %1145 = vmatmul.mubr.f32.gmra.mxu0 %v1051
        %v1146 = vpop.f32.mrf.mxu0
        %v1147 = vadd.f32 %v1017, %v1146
        %v1148 = vpop.f32.mrf.mxu0
        %v1149 = vadd.f32 %v1017, %v1148
        %1150 = vmatprep.mubr.f32.mxu0 0.0
        %1151 = vmatmul.mubr.f32.gmra.mxu0 %v1054
        %v1152 = vpop.f32.mrf.mxu0
        %v1153 = vadd.f32 %v1022, %v1152
        %v1154 = vpop.f32.mrf.mxu0
        %v1155 = vadd.f32 %v1022, %v1154
        %1156 = vmatprep.mubr.f32.mxu0 0.0
        %1157 = vmatmul.mubr.f32.gmra.mxu0 %v1057
        %v1158 = vpop.f32.mrf.mxu0
        %v1159 = vadd.f32 %v1027, %v1158
        %v1160 = vpop.f32.mrf.mxu0
        %v1161 = vadd.f32 %v1027, %v1160
        %1162 = vmatprep.mubr.f32.mxu0 0.0
        %1163 = vmatmul.mubr.f32.gmra.mxu0 %v1060
        %v1164 = vpop.f32.mrf.mxu0
        %v1165 = vadd.f32 %v1032, %v1164
        %v1166 = vpop.f32.mrf.mxu0
        %v1167 = vadd.f32 %v1032, %v1166
        %1168 = vmatprep.mubr.f32.mxu0 0.0
        %1169 = vmatmul.mubr.f32.gmra.mxu0 %v1063
        %v1170 = vpop.f32.mrf.mxu0
        %v1171 = vadd.f32 %v1037, %v1170
        %v1172 = vpop.f32.mrf.mxu0
        %v1173 = vadd.f32 %v1037, %v1172
        %1174 = vmatprep.mubr.f32.mxu0 0.0
        %1175 = vmatmul.mubr.f32.gmra.mxu0 %v1066
        %v1176 = vpop.f32.mrf.mxu0
        %v1177 = vadd.f32 %v1042, %v1176
        %v1178 = vpop.f32.mrf.mxu0
        %v1179 = vadd.f32 %v1042, %v1178
        %1180 = vdwg.mxu0
        %v1181 = vmax.f32 %v1135, 0.0
        %v1182 = vmax.f32 %v1137, 0.0
        %v1183 = vmax.f32 %v1141, 0.0
        %v1184 = vmax.f32 %v1143, 0.0
        %v1185 = vmax.f32 %v1147, 0.0
        %v1186 = vmax.f32 %v1149, 0.0
        %v1187 = vmax.f32 %v1153, 0.0
        %v1188 = vmax.f32 %v1155, 0.0
        %v1189 = vmax.f32 %v1159, 0.0
        %v1190 = vmax.f32 %v1161, 0.0
        %v1191 = vmax.f32 %v1165, 0.0
        %v1192 = vmax.f32 %v1167, 0.0
        %v1193 = vmax.f32 %v1171, 0.0
        %v1194 = vmax.f32 %v1173, 0.0
        %v1195 = vmax.f32 %v1177, 0.0
        %v1196 = vmax.f32 %v1179, 0.0
        %v1197 = vld [vmem:[%s9] sm:$0xff]
        %v1198 = vld [vmem:[%s9 + $0x8] sm:$0xff]
        %v1199 = vld [vmem:[%s10] sm:$0xff]
        %v1200 = vld [vmem:[%s10 + $0x8] sm:$0xff]
        %1202 = vset.pattern.permute.xlu0 0
        %1203 = vperm.xlu0 %1202, %v1199
        %v1204 = vpop.permute.xlu0 %1203
        %1207 = vset.pattern.permute.xlu0 0
        %1208 = vperm.xlu0 %1207, %v1200
        %v1209 = vpop.permute.xlu0 %1208
        %v1212 = vsel %vm625, %v1197, 0
        %v1215 = vsel %vm625, %v1198, 0
        %1217 = vmatprep.subr.mxu0 0.0
        %1218 = vmatpush1.msra.mxu0 0.0
        %1219 = vmatprep.subr.mxu0 0.0
        %1220 = vmatpush1.msra.mxu0 0.0
        %1221 = vmatprep.subr.mxu0 0.0
        %1222 = vmatpush1.msra.mxu0 0.0
        %1223 = vmatprep.subr.mxu0 0.0
        %1224 = vmatpush1.msra.mxu0 0.0
        %1225 = vmatprep.subr.mxu0 0.0
        %1226 = vmatpush1.msra.mxu0 0.0
        %1227 = vmatprep.subr.mxu0 0.0
        %1228 = vmatpush1.msra.mxu0 0.0
        %1229 = vmatprep.subr.mxu0 0.0
        %1230 = vmatpush1.msra.mxu0 0.0
        %1231 = vmatprep.subr.mxu0 0.0
        %1232 = vmatpush1.msra.mxu0 0.0
        %1233 = vmatprep.subr.mxu0 %v1196
        %1234 = vmatpush1.msra.mxu0 %v1195
        %1235 = vmatprep.subr.mxu0 %v1194
        %1236 = vmatpush1.msra.mxu0 %v1193
        %1237 = vmatprep.subr.mxu0 %v1192
        %1238 = vmatpush1.msra.mxu0 %v1191
        %1239 = vmatprep.subr.mxu0 %v1190
        %1240 = vmatpush1.msra.mxu0 %v1189
        %1241 = vmatprep.subr.mxu0 %v1188
        %1242 = vmatpush1.msra.mxu0 %v1187
        %1243 = vmatprep.subr.mxu0 %v1186
        %1244 = vmatpush1.msra.mxu0 %v1185
        %1245 = vmatprep.subr.mxu0 %v1184
        %1246 = vmatpush1.msra.mxu0 %v1183
        %1247 = vmatprep.subr.mxu0 %v1182
        %1248 = vmatpush1.msra.mxu0 %v1181
        %1249 = vmatprep.subr.mxu0 0.0
        %1250 = vmatpush2.msra.mxu0 0.0
        %1251 = vmatprep.subr.mxu0 0.0
        %1252 = vmatpush2.msra.mxu0 0.0
        %1253 = vmatprep.subr.mxu0 0.0
        %1254 = vmatpush2.msra.mxu0 0.0
        %1255 = vmatprep.subr.mxu0 0.0
        %1256 = vmatpush2.msra.mxu0 0.0
        %1257 = vmatprep.subr.mxu0 0.0
        %1258 = vmatpush2.msra.mxu0 0.0
        %1259 = vmatprep.subr.mxu0 0.0
        %1260 = vmatpush2.msra.mxu0 0.0
        %1261 = vmatprep.subr.mxu0 0.0
        %1262 = vmatpush2.msra.mxu0 0.0
        %1263 = vmatprep.subr.mxu0 0.0
        %1264 = vmatpush2.msra.mxu0 0.0
        %1265 = vmatprep.subr.mxu0 0.0
        %1266 = vmatpush2.msra.mxu0 0.0
        %1267 = vmatprep.subr.mxu0 0.0
        %1268 = vmatpush2.msra.mxu0 0.0
        %1269 = vmatprep.subr.mxu0 0.0
        %1270 = vmatpush2.msra.mxu0 0.0
        %1271 = vmatprep.subr.mxu0 0.0
        %1272 = vmatpush2.msra.mxu0 0.0
        %1273 = vmatprep.subr.mxu0 0.0
        %1274 = vmatpush2.msra.mxu0 0.0
        %1275 = vmatprep.subr.mxu0 0.0
        %1276 = vmatpush2.msra.mxu0 0.0
        %1277 = vmatprep.subr.mxu0 0.0
        %1278 = vmatpush2.msra.mxu0 0.0
        %1279 = vmatprep.subr.mxu0 0.0
        %1280 = vmatpush2.msra.mxu0 0.0
        %1281 = vmatprep.mubr.f32.mxu0 0.0
        %1282 = vmatmul.mubr.f32.gmra.mxu0 %v1212
        %v1283 = vpop.f32.mrf.mxu0
        %v1284 = vadd.f32 %v1204, %v1283
        %v1285 = vpop.f32.mrf.mxu0
        %v1286 = vadd.f32 %v1204, %v1285
        %1287 = vmatprep.mubr.f32.mxu0 0.0
        %1288 = vmatmul.mubr.f32.gmra.mxu0 %v1215
        %v1289 = vpop.f32.mrf.mxu0
        %v1290 = vadd.f32 %v1209, %v1289
        %v1291 = vpop.f32.mrf.mxu0
        %v1292 = vadd.f32 %v1209, %v1291
        %1293 = vdwg.mxu0
        %v1294 = vround.ne.pseudo %v1284
        %v1295 = vround.ne.pseudo %v1286
        %v1296 = vround.ne.pseudo %v1290
        %v1297 = vround.ne.pseudo %v1292
        %1298 = vst [vmem:[%s402] sm:$0xff] %v1294
        %1299 = vst [vmem:[%s402 + $0x8] sm:$0xff] %v1295
        %1300 = vst [vmem:[%s402 + $0x10] sm:$0xff] %v1296
        %1301 = vst [vmem:[%s402 + $0x18] sm:$0xff] %v1297
        %s1302 = sand.u32 %s285, 1
        %s1303 = scalar_lea.sflag [#allocation3], %s1302
        %s1304 = sand.u32 %s285, 1
        %s1305 = smul.addr %s1304, 32
        %s1306 = scalar_lea.vmem [#allocation2], %s1305
        // Predicated region
        $region65: #{tpu_custom_call.1} parent=63 // pred_check
          %p1307 = pneg %p295
        $region66: #{tpu_custom_call.1} parent=63 // pred_check_branch
          %1309 = sbr.rel (%p1307) target = $region68
        $region67: #{tpu_custom_call.1} parent=63 // pred_region
          %s1310 = smul.u32 2, %s30
          %s1312 = ssub.s32 512, 512
          %1313 = vsyncadd %s1303, %s1312
          %s1314 = smul.addr %s29, 4
          %s1315 = sadd.s32 %s1310, %s1314
          %s1316 = smul.addr %s1315, 128
          %s1317 = scalar_lea.hbm %s11, %s1316
          %s1318 = sshll.u32 %s1306, 4
          %s1319 = int_to_ptr.vmem [resolvable:$true] %s1318
          %1324 = dma.vmem_to_hbm [thread:$0]  %s1319, 512, %s1317, %s1303, 256, 256, 16
        $region68: #{tpu_custom_call.1} parent=63 // pred_fallthru
          _
      $region64: #{tpu_custom_call.1} parent=5 // pred_fallthru
        _
      %p1325 = scmp.le.s32.totalorder 2, %s20
      // Predicated region
      $region69: #{tpu_custom_call.1} parent=5 // pred_check
        %p1326 = pneg %p1325
      $region70: #{tpu_custom_call.1} parent=5 // pred_check_branch
        %1328 = sbr.rel (%p1326) target = $region72
      $region71: #{tpu_custom_call.1} parent=5 // pred_region
        %s1329 = ssub.s32 %s20, 2
        // Predicated region
        $region73: #{tpu_custom_call.1} parent=71 // pred_check
          %p1330 = pneg %p301
        $region74: #{tpu_custom_call.1} parent=71 // pred_check_branch
          %1332 = sbr.rel (%p1330) target = $region76
        $region75: #{tpu_custom_call.1} parent=71 // pred_region
          %s1333 = sand.u32 %s286, 1
          %s1334 = scalar_lea.sflag [#allocation3], %s1333
          %s1335 = sand.u32 %s286, 1
          %s1336 = smul.addr %s1335, 32
          %s1337 = scalar_lea.vmem [#allocation2], %s1336
          %1338 = dma.done %s1334, 512
        $region76: #{tpu_custom_call.1} parent=71 // pred_fallthru
          _
      $region72: #{tpu_custom_call.1} parent=5 // pred_fallthru
        _
    $region6: #{tpu_custom_call.1} parent=1 // loop_footer
      %s24 = sadd.s32 1, %s20
    $region7: #{tpu_custom_call.1} parent=1 // loop_footer_branch
      %19 = sbr.rel target = $region3
    $region8: #{tpu_custom_call.1} parent=1 // loop_exit
      _
    %1339 = vsyncpa [#allocation3], 1
    %s1340 = scalar_lea.sflag [#allocation3], 1
    %1341 = vsyncpa %s1340, 1

</llo_original>
